<compile_context>
chip_gen: v7x
topology: tpu7x:2x2x1
jax: 0.10.0
libtpu: 0.0.40
codegen_flags: <defaults>
</compile_context>

<pallas_src>
import jax
import jax.numpy as jnp
from jax import lax
from jax.experimental import pallas as pl
from jax.experimental.pallas import tpu as pltpu

BN_EPS = 1e-5


def _round_up(a, b):
    return (a + b - 1) // b * b


# ----------------------------- Pallas kernels -------------------------------

def _conv_bias_relu_kernel(p_ref, w_ref, shift_ref, o_ref):
    # p_ref: (tm, Kp) bf16 im2col patches, w_ref: (Kp, Cp) bf16 (BN scale folded in),
    # shift_ref: (1, Cp) f32, o_ref: (tm, Cp) f32.
    acc = jnp.dot(p_ref[...], w_ref[...], preferred_element_type=jnp.float32)
    o_ref[...] = jnp.maximum(acc + shift_ref[...], 0.0).astype(o_ref.dtype)


def _maxpool3x3_s2_kernel(x_ref, o_ref, hbuf, wbuf):
    # x_ref: (1, H, W, C) post-ReLU feature map (values >= 0, so zero padding
    #        is equivalent to -inf padding for the max).
    # o_ref: (1, Ho, Wo, C) with Ho = (H-1)//2 + 1, Wo = (W-1)//2 + 1
    # hbuf:  VMEM (H+2, W, C)   row-padded copy
    # wbuf:  VMEM (Ho, W+2, C)  col-padded vertical max
    _, H, W, C = x_ref.shape
    _, Ho, Wo, _ = o_ref.shape

    # vertical (H) 3-tap max, computed only at the stride-2 output rows
    hbuf[...] = jnp.zeros_like(hbuf)
    hbuf[pl.ds(1, H), :, :] = x_ref[0]
    v = jnp.maximum(
        jnp.maximum(hbuf[pl.ds(0, Ho, stride=2), :, :],
                    hbuf[pl.ds(1, Ho, stride=2), :, :]),
        hbuf[pl.ds(2, Ho, stride=2), :, :])                    # (Ho, W, C)

    # horizontal (W) 3-tap max, computed only at the stride-2 output cols
    wbuf[...] = jnp.zeros_like(wbuf)
    wbuf[:, pl.ds(1, W), :] = v
    o_ref[0] = jnp.maximum(
        jnp.maximum(wbuf[:, pl.ds(0, Wo, stride=2), :],
                    wbuf[:, pl.ds(1, Wo, stride=2), :]),
        wbuf[:, pl.ds(2, Wo, stride=2), :])


# ------------------------------- Wrapper -------------------------------------

def thermal_net_resnet_forward(x_nchw, params):
    """conv1(7x7,s2,p3) -> bn1 (eval-mode) -> relu -> maxpool(3x3,s2,p1)."""
    w_oihw = params["conv1_w"]                     # (Cout, Cin, 7, 7)
    gamma = params["bn1_gamma"].astype(jnp.float32)
    beta = params["bn1_beta"].astype(jnp.float32)
    mean = params["bn1_mean"].astype(jnp.float32)
    var = params["bn1_var"].astype(jnp.float32)

    n, cin, h, wdt = x_nchw.shape
    cout, _, kh, kw = w_oihw.shape
    stride, pad = 2, 3
    ho = (h + 2 * pad - kh) // stride + 1
    wo = (wdt + 2 * pad - kw) // stride + 1
    k = kh * kw * cin
    m = n * ho * wo

    k_pad = _round_up(k, 128)                      # 147 -> 256: lane-dense patches
    cout_pad = _round_up(cout, 128)                # 64 -> 128: lane-dense output
    tm = min(1024, _round_up(m, 8))                # fits v5e 16MiB / v7x 32MiB scoped VMEM
    m_pad = _round_up(m, tm)

    # ---- glue: NCHW -> NHWC (bf16) + im2col, K zero-padded to k_pad ---------
    # TODO(synk): building the patches inside the conv kernel (fused im2col via
    #             overlapping/Element index maps) would remove this HBM blow-up.
    x = jnp.transpose(x_nchw, (0, 2, 3, 1)).astype(jnp.bfloat16)
    xp = jnp.pad(x, ((0, 0), (pad, pad), (pad, pad), (0, 0)))
    cols = []
    for i in range(kh):
        for j in range(kw):
            cols.append(
                lax.slice(
                    xp, (0, i, j, 0),
                    (n, i + (ho - 1) * stride + 1, j + (wo - 1) * stride + 1, cin),
                    (1, stride, stride, 1)))
    if k_pad > k:
        cols.append(jnp.zeros((n, ho, wo, k_pad - k), jnp.bfloat16))
    patches = jnp.concatenate(cols, axis=-1).reshape(m, k_pad)
    if m_pad > m:
        patches = jnp.pad(patches, ((0, m_pad - m), (0, 0)))

    # ---- fold BatchNorm (eval-mode running stats) into weights / shift ------
    # TODO(synk): PyTorch default training-mode BN would use batch statistics.
    inv_std = lax.rsqrt(var + BN_EPS)
    scale = gamma * inv_std
    shift = beta - mean * scale
    w_hwio = jnp.transpose(w_oihw, (2, 3, 1, 0)).reshape(k, cout).astype(jnp.float32)
    w_folded = (w_hwio * scale[None, :]).astype(jnp.bfloat16)
    w_mat = jnp.zeros((k_pad, cout_pad), jnp.bfloat16).at[:k, :cout].set(w_folded)
    shift_row = jnp.zeros((1, cout_pad), jnp.float32).at[:, :cout].set(shift[None, :])

    # ---- Pallas kernel 1: M-tiled pipelined matmul + shift + ReLU -----------
    conv_out = pl.pallas_call(
        _conv_bias_relu_kernel,
        out_shape=jax.ShapeDtypeStruct((m_pad, cout_pad), jnp.float32),
        grid=(m_pad // tm,),
        in_specs=[
            pl.BlockSpec((tm, k_pad), lambda i: (i, 0)),
            pl.BlockSpec((k_pad, cout_pad), lambda i: (0, 0)),
            pl.BlockSpec((1, cout_pad), lambda i: (0, 0)),
        ],
        out_specs=pl.BlockSpec((tm, cout_pad), lambda i: (i, 0)),
        compiler_params=pltpu.CompilerParams(dimension_semantics=("parallel",)),
    )(patches, w_mat, shift_row)

    # keep the lane-dense 128-channel layout through the pool (padded channels are 0)
    y = conv_out[:m].reshape(n, ho, wo, cout_pad)

    # ---- Pallas kernel 2: fused 3x3 / stride-2 / pad-1 maxpool --------------
    ho_out = (ho - 1) // 2 + 1
    wo_out = (wo - 1) // 2 + 1
    # TODO(synk): for very large feature maps (e.g. 224x224 stems on v5e), tile
    #             this kernel over H with halo rows instead of one block per image.
    mp = pl.pallas_call(
        _maxpool3x3_s2_kernel,
        out_shape=jax.ShapeDtypeStruct((n, ho_out, wo_out, cout_pad), jnp.float32),
        grid=(n,),
        in_specs=[pl.BlockSpec((1, ho, wo, cout_pad), lambda b: (b, 0, 0, 0))],
        out_specs=pl.BlockSpec((1, ho_out, wo_out, cout_pad), lambda b: (b, 0, 0, 0)),
        scratch_shapes=[
            pltpu.VMEM((ho + 2, wo, cout_pad), jnp.float32),
            pltpu.VMEM((ho_out, wo + 2, cout_pad), jnp.float32),
        ],
        compiler_params=pltpu.CompilerParams(dimension_semantics=("parallel",)),
    )(y)

    # back to PyTorch NCHW convention, drop channel padding
    return jnp.transpose(mp[..., :cout], (0, 3, 1, 2))


# ------------------------------ Reference ------------------------------------

def _reference(x_nchw, params):
    w = params["conv1_w"]
    conv = lax.conv_general_dilated(
        x_nchw, w, (2, 2), ((3, 3), (3, 3)),
        dimension_numbers=("NCHW", "OIHW", "NCHW"))
    scale = params["bn1_gamma"] * lax.rsqrt(params["bn1_var"] + BN_EPS)
    shift = params["bn1_beta"] - params["bn1_mean"] * scale
    y = conv * scale[None, :, None, None] + shift[None, :, None, None]
    y = jnp.maximum(y, 0.0)
    yp = jnp.pad(y, ((0, 0), (0, 0), (1, 1), (1, 1)), constant_values=-jnp.inf)
    return lax.reduce_window(yp, -jnp.inf, lax.max, (1, 1, 3, 3), (1, 1, 2, 2), "VALID")


# -------------------------------- Main ----------------------------------------

if __name__ == "__main__":
    key = jax.random.PRNGKey(0)
    k1, k2, k3, k4, k5, k6 = jax.random.split(key, 6)

    # Deterministic synthetic parameters (shapes from resnet18 conv1 / bn1).
    params = {
        "conv1_w": 0.05 * jax.random.normal(k1, (64, 3, 7, 7), jnp.float32),
        "bn1_gamma": 1.0 + 0.1 * jax.random.normal(k2, (64,), jnp.float32),
        "bn1_beta": 0.1 * jax.random.normal(k3, (64,), jnp.float32),
        "bn1_mean": 0.1 * jax.random.normal(k4, (64,), jnp.float32),
        "bn1_var": 0.5 + 0.5 * jnp.abs(jax.random.normal(k5, (64,), jnp.float32)),
    }
    # Small input consistent with the stem: NCHW, 3 input channels.
    x = jax.random.normal(k6, (2, 3, 16, 16), jnp.float32)

    fwd = jax.jit(thermal_net_resnet_forward)
    out = jax.block_until_ready(fwd(x, params))
    ref = jax.block_until_ready(_reference(x, params))

    assert out.shape == (2, 64, 4, 4), out.shape
    max_err = float(jnp.max(jnp.abs(out - ref)))
    assert jnp.allclose(out, ref, rtol=1e-2, atol=1e-2), max_err

    print("KERNEL_OK")
</pallas_src>

<mosaic_0001>
module attributes {stable_mosaic.version = 11 : i64} {
  func.func @_conv_bias_relu_kernel(%arg0: i32, %arg1: memref<128x256xbf16, #tpu.memory_space<vmem>>, %arg2: memref<256x128xbf16, #tpu.memory_space<vmem>>, %arg3: memref<1x128xf32, #tpu.memory_space<vmem>>, %arg4: memref<128x128xf32, #tpu.memory_space<vmem>>) attributes {dimension_semantics = [#tpu.dimension_semantics<parallel>], iteration_bounds = array<i64: 1>, scalar_prefetch = 0 : i64, scratch_operands = 0 : i64, tpu.core_type = #tpu.core_type<tc>, window_params = [{transform_indices = @transform_0, window_bounds = array<i64: 128, 256>}, {pipeline_mode = #tpu.pipeline_mode<synchronous>, transform_indices = @transform_1, window_bounds = array<i64: 256, 128>}, {pipeline_mode = #tpu.pipeline_mode<synchronous>, transform_indices = @transform_2, window_bounds = array<i64: 1, 128>}, {transform_indices = @transform_3, window_bounds = array<i64: 128, 128>}]} {
    %c0 = arith.constant 0 : index
    %c0_0 = arith.constant 0 : index
    %0 = vector.load %arg1[%c0, %c0_0] : memref<128x256xbf16, #tpu.memory_space<vmem>>, vector<128x256xbf16>
    %c0_1 = arith.constant 0 : index
    %c0_2 = arith.constant 0 : index
    %1 = vector.load %arg2[%c0_1, %c0_2] : memref<256x128xbf16, #tpu.memory_space<vmem>>, vector<256x128xbf16>
    %cst = arith.constant dense<0.000000e+00> : vector<128x128xf32>
    %2 = tpu.matmul %0, %1, %cst {dimension_numbers = #tpu.dot_dimension_numbers<[1], [0], [0], [1], [0, 0, 1, 1], [], []>} : vector<128x256xbf16>, vector<256x128xbf16>, vector<128x128xf32> -> vector<128x128xf32>
    %c0_3 = arith.constant 0 : index
    %c0_4 = arith.constant 0 : index
    %3 = vector.load %arg3[%c0_3, %c0_4] : memref<1x128xf32, #tpu.memory_space<vmem>>, vector<1x128xf32>
    %4 = vector.broadcast %3 : vector<1x128xf32> to vector<128x128xf32>
    %5 = arith.addf %2, %4 : vector<128x128xf32>
    %cst_5 = arith.constant 0.000000e+00 : f32
    %6 = vector.broadcast %cst_5 : f32 to vector<128x128xf32>
    %7 = arith.maximumf %5, %6 : vector<128x128xf32>
    %c0_6 = arith.constant 0 : index
    %c0_7 = arith.constant 0 : index
    %8 = vector.load %arg4[%c0_6, %c0_7] : memref<128x128xf32, #tpu.memory_space<vmem>>, vector<128x128xf32>
    tpu.vector_store %arg4[%c0_6, %c0_7], %7 {strides = array<i32>} : memref<128x128xf32, #tpu.memory_space<vmem>>, vector<128x128xf32>,
    return
  }
  func.func @transform_0(%arg0: i32) -> (i32, i32) {
    %c0_i32 = arith.constant 0 : i32
    %c0_i32_0 = arith.constant 0 : i32
    return %arg0, %c0_i32 : i32, i32
  }
  func.func @transform_1(%arg0: i32) -> (i32, i32) {
    %c0_i32 = arith.constant 0 : i32
    %c0_i32_0 = arith.constant 0 : i32
    %c0_i32_1 = arith.constant 0 : i32
    return %c0_i32, %c0_i32_0 : i32, i32
  }
  func.func @transform_2(%arg0: i32) -> (i32, i32) {
    %c0_i32 = arith.constant 0 : i32
    %c0_i32_0 = arith.constant 0 : i32
    %c0_i32_1 = arith.constant 0 : i32
    return %c0_i32, %c0_i32_0 : i32, i32
  }
  func.func @transform_3(%arg0: i32) -> (i32, i32) {
    %c0_i32 = arith.constant 0 : i32
    %c0_i32_0 = arith.constant 0 : i32
    return %arg0, %c0_i32 : i32, i32
  }
}

module attributes {stable_mosaic.version = 11 : i64} {
  func.func @_maxpool3x3_s2_kernel(%arg0: i32, %arg1: memref<1x8x8x128xf32, #tpu.memory_space<vmem>>, %arg2: memref<1x4x4x128xf32, #tpu.memory_space<vmem>>, %arg3: memref<10x8x128xf32, #tpu.memory_space<vmem>>, %arg4: memref<4x10x128xf32, #tpu.memory_space<vmem>>) attributes {dimension_semantics = [#tpu.dimension_semantics<parallel>], iteration_bounds = array<i64: 2>, scalar_prefetch = 0 : i64, scratch_operands = 2 : i64, tpu.core_type = #tpu.core_type<tc>, window_params = [{transform_indices = @transform_0, window_bounds = array<i64: 1, 8, 8, 128>}, {transform_indices = @transform_1, window_bounds = array<i64: 1, 4, 4, 128>}]} {
    %cst = arith.constant 0.000000e+00 : f32
    %0 = vector.broadcast %cst : f32 to vector<10x8x128xf32>
    %c0 = arith.constant 0 : index
    %c0_0 = arith.constant 0 : index
    %c0_1 = arith.constant 0 : index
    %1 = vector.load %arg3[%c0, %c0_0, %c0_1] : memref<10x8x128xf32, #tpu.memory_space<vmem>>, vector<10x8x128xf32>
    tpu.vector_store %arg3[%c0, %c0_0, %c0_1], %0 {strides = array<i32>} : memref<10x8x128xf32, #tpu.memory_space<vmem>>, vector<10x8x128xf32>,
    %c0_2 = arith.constant 0 : index
    %c0_3 = arith.constant 0 : index
    %c0_4 = arith.constant 0 : index
    %c0_5 = arith.constant 0 : index
    %2 = vector.load %arg1[%c0_2, %c0_3, %c0_4, %c0_5] : memref<1x8x8x128xf32, #tpu.memory_space<vmem>>, vector<1x8x8x128xf32>
    %3 = vector.shape_cast %2 : vector<1x8x8x128xf32> to vector<8x8x128xf32>
    %c1 = arith.constant 1 : index
    %c0_6 = arith.constant 0 : index
    %c0_7 = arith.constant 0 : index
    %4 = vector.load %arg3[%c1, %c0_6, %c0_7] : memref<10x8x128xf32, #tpu.memory_space<vmem>>, vector<8x8x128xf32>
    tpu.vector_store %arg3[%c1, %c0_6, %c0_7], %3 {strides = array<i32>} : memref<10x8x128xf32, #tpu.memory_space<vmem>>, vector<8x8x128xf32>,
    %c0_8 = arith.constant 0 : index
    %c0_9 = arith.constant 0 : index
    %c0_10 = arith.constant 0 : index
    %5 = tpu.strided_load %arg3[%c0_8, %c0_9, %c0_10] {strides = array<i32: 2, 1, 1>} : memref<10x8x128xf32, #tpu.memory_space<vmem>>, vector<4x8x128xf32>
    %c1_11 = arith.constant 1 : index
    %c0_12 = arith.constant 0 : index
    %c0_13 = arith.constant 0 : index
    %6 = tpu.strided_load %arg3[%c1_11, %c0_12, %c0_13] {strides = array<i32: 2, 1, 1>} : memref<10x8x128xf32, #tpu.memory_space<vmem>>, vector<4x8x128xf32>
    %7 = arith.maximumf %5, %6 : vector<4x8x128xf32>
    %c2 = arith.constant 2 : index
    %c0_14 = arith.constant 0 : index
    %c0_15 = arith.constant 0 : index
    %8 = tpu.strided_load %arg3[%c2, %c0_14, %c0_15] {strides = array<i32: 2, 1, 1>} : memref<10x8x128xf32, #tpu.memory_space<vmem>>, vector<4x8x128xf32>
    %9 = arith.maximumf %7, %8 : vector<4x8x128xf32>
    %cst_16 = arith.constant 0.000000e+00 : f32
    %10 = vector.broadcast %cst_16 : f32 to vector<4x10x128xf32>
    %c0_17 = arith.constant 0 : index
    %c0_18 = arith.constant 0 : index
    %c0_19 = arith.constant 0 : index
    %11 = vector.load %arg4[%c0_17, %c0_18, %c0_19] : memref<4x10x128xf32, #tpu.memory_space<vmem>>, vector<4x10x128xf32>
    tpu.vector_store %arg4[%c0_17, %c0_18, %c0_19], %10 {strides = array<i32>} : memref<4x10x128xf32, #tpu.memory_space<vmem>>, vector<4x10x128xf32>,
    %c0_20 = arith.constant 0 : index
    %c1_21 = arith.constant 1 : index
    %c0_22 = arith.constant 0 : index
    %12 = vector.load %arg4[%c0_20, %c1_21, %c0_22] : memref<4x10x128xf32, #tpu.memory_space<vmem>>, vector<4x8x128xf32>
    tpu.vector_store %arg4[%c0_20, %c1_21, %c0_22], %9 {strides = array<i32>} : memref<4x10x128xf32, #tpu.memory_space<vmem>>, vector<4x8x128xf32>,
    %c0_23 = arith.constant 0 : index
    %c0_24 = arith.constant 0 : index
    %c0_25 = arith.constant 0 : index
    %13 = tpu.strided_load %arg4[%c0_23, %c0_24, %c0_25] {strides = array<i32: 1, 2, 1>} : memref<4x10x128xf32, #tpu.memory_space<vmem>>, vector<4x4x128xf32>
    %c0_26 = arith.constant 0 : index
    %c1_27 = arith.constant 1 : index
    %c0_28 = arith.constant 0 : index
    %14 = tpu.strided_load %arg4[%c0_26, %c1_27, %c0_28] {strides = array<i32: 1, 2, 1>} : memref<4x10x128xf32, #tpu.memory_space<vmem>>, vector<4x4x128xf32>
    %15 = arith.maximumf %13, %14 : vector<4x4x128xf32>
    %c0_29 = arith.constant 0 : index
    %c2_30 = arith.constant 2 : index
    %c0_31 = arith.constant 0 : index
    %16 = tpu.strided_load %arg4[%c0_29, %c2_30, %c0_31] {strides = array<i32: 1, 2, 1>} : memref<4x10x128xf32, #tpu.memory_space<vmem>>, vector<4x4x128xf32>
    %17 = arith.maximumf %15, %16 : vector<4x4x128xf32>
    %c0_32 = arith.constant 0 : index
    %c0_33 = arith.constant 0 : index
    %c0_34 = arith.constant 0 : index
    %c0_35 = arith.constant 0 : index
    %18 = vector.load %arg2[%c0_32, %c0_33, %c0_34, %c0_35] : memref<1x4x4x128xf32, #tpu.memory_space<vmem>>, vector<1x4x4x128xf32>
    %19 = vector.shape_cast %18 : vector<1x4x4x128xf32> to vector<4x4x128xf32>
    %20 = vector.shape_cast %17 : vector<4x4x128xf32> to vector<1x4x4x128xf32>
    tpu.vector_store %arg2[%c0_32, %c0_33, %c0_34, %c0_35], %20 {strides = array<i32>} : memref<1x4x4x128xf32, #tpu.memory_space<vmem>>, vector<1x4x4x128xf32>,
    return
  }
  func.func @transform_0(%arg0: i32) -> (i32, i32, i32, i32) {
    %c0_i32 = arith.constant 0 : i32
    %c0_i32_0 = arith.constant 0 : i32
    %c0_i32_1 = arith.constant 0 : i32
    %c0_i32_2 = arith.constant 0 : i32
    return %arg0, %c0_i32, %c0_i32_0, %c0_i32_1 : i32, i32, i32, i32
  }
  func.func @transform_1(%arg0: i32) -> (i32, i32, i32, i32) {
    %c0_i32 = arith.constant 0 : i32
    %c0_i32_0 = arith.constant 0 : i32
    %c0_i32_1 = arith.constant 0 : i32
    %c0_i32_2 = arith.constant 0 : i32
    return %arg0, %c0_i32, %c0_i32_0, %c0_i32_1 : i32, i32, i32, i32
  }
}

</mosaic_0001>

<llo_original>
// kernel: thermal_net_resnet_forward.3
$region0: #{thermal_net_resnet_forward.3}
  #allocation0 [shape = 'u32[]', space=smem, size = 0x4, offset = 0x4, fixed_abs, tag = 'smem constant byte address 0x4 - core index']
  #allocation1 [shape = 'u32[144,128]{1,0:T(1,128)}', space=vmem, size = 0x12000, scoped, tag = 'internal scratch']
  #allocation2 [shape = 'f32[10,8,128]{2,1,0:T(8,128)}', space=vmem, size = 0xa000, scoped, tag = 'scratch operand']
  #allocation3 [shape = 'f32[4,10,128]{2,1,0:T(8,128)}', space=vmem, size = 0x8000, scoped, tag = 'scratch operand']
  %s0 = inlined_call_operand.vmem [shape: f32[2,8,8,128], index: 0, kind: input, shape index: {}]
  %s1 = inlined_call_operand.vmem [shape: f32[2,4,4,128], index: 1, kind: output, shape index: {}]
  %s2 = sld [smem:[#allocation0]]
  $region37: #{thermal_net_resnet_forward.3} parent=0
    _
  %s4 = ssub.s32 1, %s2
  %s5 = scalar_select 0, %s4, %s2
  loop: start=0, step=1, limit=4
  $region2: #{thermal_net_resnet_forward.3} parent=0 // loop_pre_header
    _
  $region3: #{thermal_net_resnet_forward.3} parent=0 // loop_header
    %s7 = sphi 0, %s11
    %p8 = scmp.ge.s32.totalorder %s7, 4
    %s17 = sphi 0, %s19
    %s20 = sphi 0, %s17
    %s21 = sphi 0, %s20
    %s37 = sphi 0, %s21
    %s43 = sphi 0, %s45
    %s46 = sphi 0, %s43
    %s47 = sphi 0, %s46
    %s63 = sphi 0, %s47
  $region4: #{thermal_net_resnet_forward.3} parent=0 // loop_header_branch
    %10 = sbr.rel (%p8) target = $region8
  $region5: #{thermal_net_resnet_forward.3} parent=0 // loop_body
    %s12 = ssub.s32 %s7, 1
    %s13 = ssub.s32 %s7, 2
    %s14 = sadd.s32 %s7, 1
    %s15 = ssub.s32 %s7, %s14
    %p16 = scmp.eq.s32.totalorder %s15, 0
    %s18 = sadd.s32 %s17, 1
    %s19 = scalar_select %p16, %s17, %s18
    %p22 = pneg %p16
    %p23 = scmp.eq.s32.totalorder %s7, 1
    %p24 = por %p22, %p23
    %p25 = scmp.ne.s32.totalorder %s17, %s20
    %p26 = scmp.eq.s32.totalorder %s7, 0
    %p27 = por %p25, %p26
    %p28 = scmp.ne.s32.totalorder %s17, %s20
    %p29 = scmp.eq.s32.totalorder %s12, 1
    %p30 = por %p28, %p29
    %p31 = scmp.ne.s32.totalorder %s20, %s21
    %p32 = scmp.eq.s32.totalorder %s12, 0
    %p33 = por %p31, %p32
    %p34 = scmp.ne.s32.totalorder %s20, %s21
    %p35 = scmp.eq.s32.totalorder %s13, 1
    %p36 = por %p34, %p35
    %p38 = scmp.ne.s32.totalorder %s21, %s37
    %p39 = scmp.eq.s32.totalorder %s13, 0
    %p40 = por %p38, %p39
    %s41 = ssub.s32 %s7, %s14
    %p42 = scmp.eq.s32.totalorder %s41, 0
    %s44 = sadd.s32 %s43, 1
    %s45 = scalar_select %p42, %s43, %s44
    %p48 = pneg %p42
    %p49 = scmp.eq.s32.totalorder %s7, 1
    %p50 = por %p48, %p49
    %p51 = scmp.ne.s32.totalorder %s43, %s46
    %p52 = scmp.eq.s32.totalorder %s7, 0
    %p53 = por %p51, %p52
    %p54 = scmp.ne.s32.totalorder %s43, %s46
    %p55 = scmp.eq.s32.totalorder %s12, 1
    %p56 = por %p54, %p55
    %p57 = scmp.ne.s32.totalorder %s46, %s47
    %p58 = scmp.eq.s32.totalorder %s12, 0
    %p59 = por %p57, %p58
    %p60 = scmp.ne.s32.totalorder %s46, %s47
    %p61 = scmp.eq.s32.totalorder %s13, 1
    %p62 = por %p60, %p61
    %p64 = scmp.ne.s32.totalorder %s47, %s63
    %p65 = scmp.eq.s32.totalorder %s13, 0
    %p66 = por %p64, %p65
    %p67 = scmp.le.s32.totalorder 1, %s7
    %p68 = scmp.lt.s32.totalorder %s7, 3
    %p69 = pnand %p67, %p68
    %p70 = pneg %p69
    // Predicated region
    $region9: #{thermal_net_resnet_forward.3} parent=5 // pred_check
      _
    $region10: #{thermal_net_resnet_forward.3} parent=5 // pred_check_branch
      %72 = sbr.rel (%p69) target = $region12
    $region11: #{thermal_net_resnet_forward.3} parent=5 // pred_region
      %s73 = ssub.s32 %s7, 1
    $region12: #{thermal_net_resnet_forward.3} parent=5 // pred_fallthru
      _
    %p74 = scmp.lt.s32.totalorder %s7, 2
    // Predicated region
    $region13: #{thermal_net_resnet_forward.3} parent=5 // pred_check
      %p75 = pneg %p74
    $region14: #{thermal_net_resnet_forward.3} parent=5 // pred_check_branch
      %77 = sbr.rel (%p75) target = $region16
    $region15: #{thermal_net_resnet_forward.3} parent=5 // pred_region
      // Predicated region
      $region17: #{thermal_net_resnet_forward.3} parent=15 // pred_check
        %p78 = pneg %p27
      $region18: #{thermal_net_resnet_forward.3} parent=15 // pred_check_branch
        %80 = sbr.rel (%p78) target = $region20
      $region19: #{thermal_net_resnet_forward.3} parent=15 // pred_region
        %p81 = scmp.lt.s32.totalorder %s7, 1
        %s82 = scalar_select %p81, %s7, 1
        %s83 = smul.addr %s82, 8
        %s84 = smul.addr %s83, 8
        %s85 = scalar_lea.vmem %s0, %s84
      $region20: #{thermal_net_resnet_forward.3} parent=15 // pred_fallthru
        _
    $region16: #{thermal_net_resnet_forward.3} parent=5 // pred_fallthru
      _
    %p86 = scmp.le.s32.totalorder 1, %s7
    %p87 = scmp.lt.s32.totalorder %s7, 3
    %p88 = pnand %p86, %p87
    %p89 = pneg %p88
    // Predicated region
    $region21: #{thermal_net_resnet_forward.3} parent=5 // pred_check
      _
    $region22: #{thermal_net_resnet_forward.3} parent=5 // pred_check_branch
      %91 = sbr.rel (%p88) target = $region24
    $region23: #{thermal_net_resnet_forward.3} parent=5 // pred_region
      %s92 = ssub.s32 %s7, 1
      %p93 = scmp.lt.s32.totalorder %s12, 1
      %s94 = scalar_select %p93, %s12, 1
      %s95 = smul.addr %s94, 8
      %s96 = smul.addr %s95, 8
      %s97 = scalar_lea.vmem %s0, %s96
      %p98 = pneg %p33
      %p99 = pneg %p30
      %p100 = pneg %p59
      %p101 = pneg %p56
      %p102 = scmp.lt.s32.totalorder %s12, 1
      %s103 = scalar_select %p102, %s12, 1
      %s104 = smul.addr %s103, 4
      %s105 = smul.addr %s104, 4
      %s106 = scalar_lea.vmem %s1, %s105
      %p107 = scmp.lt.s32.totalorder %s12, 1
      %s108 = scalar_select %p107, %s12, 1
      %s109 = smul.addr %s108, 8
      %s110 = smul.addr %s109, 8
      %s111 = scalar_lea.vmem %s0, %s110
      %p112 = scmp.lt.s32.totalorder %s12, 1
      %s113 = scalar_select %p112, %s12, 1
      %s114 = smul.addr %s113, 4
      %s115 = smul.addr %s114, 4
      %s116 = scalar_lea.vmem %s1, %s115
      %117 = vst [vmem:[#allocation2] sm:$0xff] 0.0
      %118 = vst [vmem:[#allocation2 + $0x8] sm:$0xff] 0.0
      %119 = vst [vmem:[#allocation2 + $0x10] sm:$0xff] 0.0
      %120 = vst [vmem:[#allocation2 + $0x18] sm:$0xff] 0.0
      %121 = vst [vmem:[#allocation2 + $0x20] sm:$0xff] 0.0
      %122 = vst [vmem:[#allocation2 + $0x28] sm:$0xff] 0.0
      %123 = vst [vmem:[#allocation2 + $0x30] sm:$0xff] 0.0
      %124 = vst [vmem:[#allocation2 + $0x38] sm:$0xff] 0.0
      %125 = vst [vmem:[#allocation2 + $0x40] sm:$0xff] 0.0
      %126 = vst [vmem:[#allocation2 + $0x48] sm:$0xff] 0.0
      %v127 = vld [vmem:[%s111] sm:$0xff]
      %v128 = vld [vmem:[%s111 + $0x8] sm:$0xff]
      %v129 = vld [vmem:[%s111 + $0x10] sm:$0xff]
      %v130 = vld [vmem:[%s111 + $0x18] sm:$0xff]
      %v131 = vld [vmem:[%s111 + $0x20] sm:$0xff]
      %v132 = vld [vmem:[%s111 + $0x28] sm:$0xff]
      %v133 = vld [vmem:[%s111 + $0x30] sm:$0xff]
      %v134 = vld [vmem:[%s111 + $0x38] sm:$0xff]
      %s135 = scalar_lea.vmem [#allocation2], 8
      %136 = vst [vmem:[%s135] sm:$0xff] %v127
      %137 = vst [vmem:[%s135 + $0x8] sm:$0xff] %v128
      %138 = vst [vmem:[%s135 + $0x10] sm:$0xff] %v129
      %139 = vst [vmem:[%s135 + $0x18] sm:$0xff] %v130
      %140 = vst [vmem:[%s135 + $0x20] sm:$0xff] %v131
      %141 = vst [vmem:[%s135 + $0x28] sm:$0xff] %v132
      %142 = vst [vmem:[%s135 + $0x30] sm:$0xff] %v133
      %143 = vst [vmem:[%s135 + $0x38] sm:$0xff] %v134
      %v144 = vld [vmem:[#allocation2] sm:$0xff]
      %v145 = vld [vmem:[#allocation2 + $0x10] sm:$0xff]
      %v146 = vld [vmem:[#allocation2 + $0x20] sm:$0xff]
      %v147 = vld [vmem:[#allocation2 + $0x30] sm:$0xff]
      %v148 = vld [vmem:[%s135] sm:$0xff]
      %v149 = vld [vmem:[%s135 + $0x10] sm:$0xff]
      %v150 = vld [vmem:[%s135 + $0x20] sm:$0xff]
      %v151 = vld [vmem:[%s135 + $0x30] sm:$0xff]
      %v152 = vmax.f32 %v144, %v148
      %v153 = vmax.f32 %v145, %v149
      %v154 = vmax.f32 %v146, %v150
      %v155 = vmax.f32 %v147, %v151
      %s156 = scalar_lea.vmem [#allocation2], 16
      %v157 = vld [vmem:[%s156] sm:$0xff]
      %v158 = vld [vmem:[%s156 + $0x10] sm:$0xff]
      %v159 = vld [vmem:[%s156 + $0x20] sm:$0xff]
      %v160 = vld [vmem:[%s156 + $0x30] sm:$0xff]
      %v161 = vmax.f32 %v152, %v157
      %v162 = vmax.f32 %v153, %v158
      %v163 = vmax.f32 %v154, %v159
      %v164 = vmax.f32 %v155, %v160
      %165 = vst [vmem:[#allocation3] sm:$0xff] 0.0
      %166 = vst [vmem:[#allocation3 + $0x8] sm:$0x3] 0.0
      %167 = vst [vmem:[#allocation3 + $0x10] sm:$0xff] 0.0
      %168 = vst [vmem:[#allocation3 + $0x18] sm:$0x3] 0.0
      %169 = vst [vmem:[#allocation3 + $0x20] sm:$0xff] 0.0
      %170 = vst [vmem:[#allocation3 + $0x28] sm:$0x3] 0.0
      %171 = vst [vmem:[#allocation3 + $0x30] sm:$0xff] 0.0
      %172 = vst [vmem:[#allocation3 + $0x38] sm:$0x3] 0.0
      %173 = vst [vmem:[#allocation3 + $0x1] sm:$0xff] %v161
      %174 = vst [vmem:[#allocation3 + $0x11] sm:$0xff] %v162
      %175 = vst [vmem:[#allocation3 + $0x21] sm:$0xff] %v163
      %176 = vst [vmem:[#allocation3 + $0x31] sm:$0xff] %v164
      %v177 = vld [vmem:[#allocation3] ss:$2 sm:$0xf]
      %s178 = scalar_lea.vmem [#allocation3], 16
      %v179 = vld [vmem:[%s178] ss:$2 sm:$0xf]
      %s180 = scalar_lea.vmem [#allocation3], 32
      %v181 = vld [vmem:[%s180] ss:$2 sm:$0xf]
      %s182 = scalar_lea.vmem [#allocation3], 48
      %v183 = vld [vmem:[%s182] ss:$2 sm:$0xf]
      %s184 = scalar_lea.vmem [#allocation3], 1
      %v185 = vld [vmem:[%s184] ss:$2 sm:$0xf]
      %s186 = scalar_lea.vmem [#allocation3], 17
      %v187 = vld [vmem:[%s186] ss:$2 sm:$0xf]
      %s188 = scalar_lea.vmem [#allocation3], 33
      %v189 = vld [vmem:[%s188] ss:$2 sm:$0xf]
      %s190 = scalar_lea.vmem [#allocation3], 49
      %v191 = vld [vmem:[%s190] ss:$2 sm:$0xf]
      %v192 = vmax.f32 %v177, %v185
      %v193 = vmax.f32 %v179, %v187
      %v194 = vmax.f32 %v181, %v189
      %v195 = vmax.f32 %v183, %v191
      %s196 = scalar_lea.vmem [#allocation3], 2
      %v197 = vld [vmem:[%s196] ss:$2 sm:$0xf]
      %s198 = scalar_lea.vmem [#allocation3], 18
      %v199 = vld [vmem:[%s198] ss:$2 sm:$0xf]
      %s200 = scalar_lea.vmem [#allocation3], 34
      %v201 = vld [vmem:[%s200] ss:$2 sm:$0xf]
      %s202 = scalar_lea.vmem [#allocation3], 50
      %v203 = vld [vmem:[%s202] ss:$2 sm:$0xf]
      %v204 = vmax.f32 %v192, %v197
      %v205 = vmax.f32 %v193, %v199
      %v206 = vmax.f32 %v194, %v201
      %v207 = vmax.f32 %v195, %v203
      %208 = vst [vmem:[%s116] sm:$0xf] %v204
      %209 = vst [vmem:[%s116 + $0x4] sm:$0xf] %v205
      %210 = vst [vmem:[%s116 + $0x8] sm:$0xf] %v206
      %211 = vst [vmem:[%s116 + $0xc] sm:$0xf] %v207
      %p212 = scmp.lt.s32.totalorder %s12, 1
      %s213 = scalar_select %p212, %s12, 1
      %s214 = smul.addr %s213, 4
      %s215 = smul.addr %s214, 4
      %s216 = scalar_lea.vmem %s1, %s215
      // Predicated region
      $region25: #{thermal_net_resnet_forward.3} parent=23 // pred_check
        %p217 = pneg %p56
      $region26: #{thermal_net_resnet_forward.3} parent=23 // pred_check_branch
        %219 = sbr.rel (%p217) target = $region28
      $region27: #{thermal_net_resnet_forward.3} parent=23 // pred_region
        _
      $region28: #{thermal_net_resnet_forward.3} parent=23 // pred_fallthru
        _
    $region24: #{thermal_net_resnet_forward.3} parent=5 // pred_fallthru
      _
    %p220 = scmp.le.s32.totalorder 2, %s7
    // Predicated region
    $region29: #{thermal_net_resnet_forward.3} parent=5 // pred_check
      %p221 = pneg %p220
    $region30: #{thermal_net_resnet_forward.3} parent=5 // pred_check_branch
      %223 = sbr.rel (%p221) target = $region32
    $region31: #{thermal_net_resnet_forward.3} parent=5 // pred_region
      %s224 = ssub.s32 %s7, 2
      // Predicated region
      $region33: #{thermal_net_resnet_forward.3} parent=31 // pred_check
        %p225 = pneg %p62
      $region34: #{thermal_net_resnet_forward.3} parent=31 // pred_check_branch
        %227 = sbr.rel (%p225) target = $region36
      $region35: #{thermal_net_resnet_forward.3} parent=31 // pred_region
        %p228 = scmp.lt.s32.totalorder %s13, 1
        %s229 = scalar_select %p228, %s13, 1
        %s230 = smul.addr %s229, 4
        %s231 = smul.addr %s230, 4
        %s232 = scalar_lea.vmem %s1, %s231
      $region36: #{thermal_net_resnet_forward.3} parent=31 // pred_fallthru
        _
    $region32: #{thermal_net_resnet_forward.3} parent=5 // pred_fallthru
      _
  $region6: #{thermal_net_resnet_forward.3} parent=0 // loop_footer
    %s11 = sadd.s32 1, %s7
  $region7: #{thermal_net_resnet_forward.3} parent=0 // loop_footer_branch
    %6 = sbr.rel target = $region3
  $region8: #{thermal_net_resnet_forward.3} parent=0 // loop_exit
    _

// kernel: thermal_net_resnet_forward.2
$region0: #{thermal_net_resnet_forward.2}
  #allocation0 [shape = 'u32[]', space=smem, size = 0x4, offset = 0x4, fixed_abs, tag = 'smem constant byte address 0x4 - core index']
  #allocation1 [shape = 'u32[144,128]{1,0:T(1,128)}', space=vmem, size = 0x12000, scoped, tag = 'internal scratch']
  %s0 = inlined_call_operand.vmem [shape: bf16[128,256], index: 0, kind: input, shape index: {}]
  %s1 = inlined_call_operand.vmem [shape: bf16[256,128], index: 1, kind: input, shape index: {}]
  %s2 = inlined_call_operand.vmem [shape: f32[1,128], index: 2, kind: input, shape index: {}]
  %s3 = inlined_call_operand.vmem [shape: f32[128,128], index: 3, kind: output, shape index: {}]
  %s4 = sld [smem:[#allocation0]]
  $region22: #{thermal_net_resnet_forward.2} parent=0
    _
  %s6 = ssub.s32 1, %s4
  %s7 = scalar_select 0, %s6, %s4
  // Predicated region
  $region2: #{thermal_net_resnet_forward.2} parent=0 // pred_check
    _
  $region3: #{thermal_net_resnet_forward.2} parent=0 // pred_check_branch
    %9 = sbr.rel (0) target = $region5
  $region4: #{thermal_net_resnet_forward.2} parent=0 // pred_region
    _
  $region5: #{thermal_net_resnet_forward.2} parent=0 // pred_fallthru
    _
  // Predicated region
  $region6: #{thermal_net_resnet_forward.2} parent=0 // pred_check
    _
  $region7: #{thermal_net_resnet_forward.2} parent=0 // pred_check_branch
    %11 = sbr.rel (0) target = $region9
  $region8: #{thermal_net_resnet_forward.2} parent=0 // pred_region
    _
  $region9: #{thermal_net_resnet_forward.2} parent=0 // pred_fallthru
    _
  // Predicated region
  $region10: #{thermal_net_resnet_forward.2} parent=0 // pred_check
    _
  $region11: #{thermal_net_resnet_forward.2} parent=0 // pred_check_branch
    %13 = sbr.rel (0) target = $region13
  $region12: #{thermal_net_resnet_forward.2} parent=0 // pred_region
    _
  $region13: #{thermal_net_resnet_forward.2} parent=0 // pred_fallthru
    _
  %v15 = vld [vmem:[%s0] sm:$0xff]
  %v16 = vld [vmem:[%s0 + $0x8] sm:$0xff]
  %v17 = vld [vmem:[%s0 + $0x10] sm:$0xff]
  %v18 = vld [vmem:[%s0 + $0x18] sm:$0xff]
  %v19 = vld [vmem:[%s0 + $0x20] sm:$0xff]
  %v20 = vld [vmem:[%s0 + $0x28] sm:$0xff]
  %v21 = vld [vmem:[%s0 + $0x30] sm:$0xff]
  %v22 = vld [vmem:[%s0 + $0x38] sm:$0xff]
  %v23 = vld [vmem:[%s0 + $0x40] sm:$0xff]
  %v24 = vld [vmem:[%s0 + $0x48] sm:$0xff]
  %v25 = vld [vmem:[%s0 + $0x50] sm:$0xff]
  %v26 = vld [vmem:[%s0 + $0x58] sm:$0xff]
  %v27 = vld [vmem:[%s0 + $0x60] sm:$0xff]
  %v28 = vld [vmem:[%s0 + $0x68] sm:$0xff]
  %v29 = vld [vmem:[%s0 + $0x70] sm:$0xff]
  %v30 = vld [vmem:[%s0 + $0x78] sm:$0xff]
  %v31 = vld [vmem:[%s1] sm:$0xf]
  %v32 = vld [vmem:[%s1 + $0x4] sm:$0xf]
  %v33 = vld [vmem:[%s1 + $0x8] sm:$0xf]
  %v34 = vld [vmem:[%s1 + $0xc] sm:$0xf]
  %v35 = vld [vmem:[%s1 + $0x10] sm:$0xf]
  %v36 = vld [vmem:[%s1 + $0x14] sm:$0xf]
  %v37 = vld [vmem:[%s1 + $0x18] sm:$0xf]
  %v38 = vld [vmem:[%s1 + $0x1c] sm:$0xf]
  %v39 = vld [vmem:[%s1 + $0x20] sm:$0xf]
  %v40 = vld [vmem:[%s1 + $0x24] sm:$0xf]
  %v41 = vld [vmem:[%s1 + $0x28] sm:$0xf]
  %v42 = vld [vmem:[%s1 + $0x2c] sm:$0xf]
  %v43 = vld [vmem:[%s1 + $0x30] sm:$0xf]
  %v44 = vld [vmem:[%s1 + $0x34] sm:$0xf]
  %v45 = vld [vmem:[%s1 + $0x38] sm:$0xf]
  %v46 = vld [vmem:[%s1 + $0x3c] sm:$0xf]
  %v47 = vld [vmem:[%s1 + $0x40] sm:$0xf]
  %v48 = vld [vmem:[%s1 + $0x44] sm:$0xf]
  %v49 = vld [vmem:[%s1 + $0x48] sm:$0xf]
  %v50 = vld [vmem:[%s1 + $0x4c] sm:$0xf]
  %v51 = vld [vmem:[%s1 + $0x50] sm:$0xf]
  %v52 = vld [vmem:[%s1 + $0x54] sm:$0xf]
  %v53 = vld [vmem:[%s1 + $0x58] sm:$0xf]
  %v54 = vld [vmem:[%s1 + $0x5c] sm:$0xf]
  %v55 = vld [vmem:[%s1 + $0x60] sm:$0xf]
  %v56 = vld [vmem:[%s1 + $0x64] sm:$0xf]
  %v57 = vld [vmem:[%s1 + $0x68] sm:$0xf]
  %v58 = vld [vmem:[%s1 + $0x6c] sm:$0xf]
  %v59 = vld [vmem:[%s1 + $0x70] sm:$0xf]
  %v60 = vld [vmem:[%s1 + $0x74] sm:$0xf]
  %v61 = vld [vmem:[%s1 + $0x78] sm:$0xf]
  %v62 = vld [vmem:[%s1 + $0x7c] sm:$0xf]
  %v63 = vld [vmem:[%s2] sm:$0x1]
  %v65 = vlaneseq
  %v66 = vshrl.u32 %v65, 7
  %v67 = vsub.s32 0, %v66
  %v68 = vrot.slane %v63, %v67
  %v86 = vunpack.c.l.b16 %v15
  %v87 = vunpack.c.h.b16 %v15
  %v88 = vunpack.c.l.b16 %v16
  %v89 = vunpack.c.h.b16 %v16
  %v90 = vunpack.c.l.b16 %v17
  %v91 = vunpack.c.h.b16 %v17
  %v92 = vunpack.c.l.b16 %v18
  %v93 = vunpack.c.h.b16 %v18
  %v94 = vunpack.c.l.b16 %v19
  %v95 = vunpack.c.h.b16 %v19
  %v96 = vunpack.c.l.b16 %v20
  %v97 = vunpack.c.h.b16 %v20
  %v98 = vunpack.c.l.b16 %v21
  %v99 = vunpack.c.h.b16 %v21
  %v100 = vunpack.c.l.b16 %v22
  %v101 = vunpack.c.h.b16 %v22
  %v102 = vunpack.c.l.b16 %v23
  %v103 = vunpack.c.h.b16 %v23
  %v104 = vunpack.c.l.b16 %v24
  %v105 = vunpack.c.h.b16 %v24
  %v106 = vunpack.c.l.b16 %v25
  %v107 = vunpack.c.h.b16 %v25
  %v108 = vunpack.c.l.b16 %v26
  %v109 = vunpack.c.h.b16 %v26
  %v110 = vunpack.c.l.b16 %v27
  %v111 = vunpack.c.h.b16 %v27
  %v112 = vunpack.c.l.b16 %v28
  %v113 = vunpack.c.h.b16 %v28
  %v114 = vunpack.c.l.b16 %v29
  %v115 = vunpack.c.h.b16 %v29
  %v116 = vunpack.c.l.b16 %v30
  %v117 = vunpack.c.h.b16 %v30
  %v118 = vpack.c.b16 %v88, %v86
  %v119 = vpack.c.b16 %v89, %v87
  %v120 = vpack.c.b16 %v92, %v90
  %v121 = vpack.c.b16 %v93, %v91
  %v122 = vpack.c.b16 %v96, %v94
  %v123 = vpack.c.b16 %v97, %v95
  %v124 = vpack.c.b16 %v100, %v98
  %v125 = vpack.c.b16 %v101, %v99
  %v126 = vpack.c.b16 %v104, %v102
  %v127 = vpack.c.b16 %v105, %v103
  %v128 = vpack.c.b16 %v108, %v106
  %v129 = vpack.c.b16 %v109, %v107
  %v130 = vpack.c.b16 %v112, %v110
  %v131 = vpack.c.b16 %v113, %v111
  %v132 = vpack.c.b16 %v116, %v114
  %v133 = vpack.c.b16 %v117, %v115
  %v182 = vunpack.c.l.b16 %v31
  %v183 = vunpack.c.l.b16 %v32
  %v184 = vunpack.c.l.b16 %v33
  %v185 = vunpack.c.l.b16 %v34
  %v186 = vunpack.c.l.b16 %v35
  %v187 = vunpack.c.l.b16 %v36
  %v188 = vunpack.c.l.b16 %v37
  %v189 = vunpack.c.l.b16 %v38
  %v190 = vunpack.c.l.b16 %v39
  %v191 = vunpack.c.l.b16 %v40
  %v192 = vunpack.c.l.b16 %v41
  %v193 = vunpack.c.l.b16 %v42
  %v194 = vunpack.c.l.b16 %v43
  %v195 = vunpack.c.l.b16 %v44
  %v196 = vunpack.c.l.b16 %v45
  %v197 = vunpack.c.l.b16 %v46
  %v198 = vunpack.c.l.b16 %v47
  %v199 = vunpack.c.l.b16 %v48
  %v200 = vunpack.c.l.b16 %v49
  %v201 = vunpack.c.l.b16 %v50
  %v202 = vunpack.c.l.b16 %v51
  %v203 = vunpack.c.l.b16 %v52
  %v204 = vunpack.c.l.b16 %v53
  %v205 = vunpack.c.l.b16 %v54
  %v206 = vunpack.c.l.b16 %v55
  %v207 = vunpack.c.l.b16 %v56
  %v208 = vunpack.c.l.b16 %v57
  %v209 = vunpack.c.l.b16 %v58
  %v210 = vunpack.c.l.b16 %v59
  %v211 = vunpack.c.l.b16 %v60
  %v212 = vunpack.c.l.b16 %v61
  %v213 = vunpack.c.l.b16 %v62
  %v214 = vpack.c.b16 %v183, %v182
  %v215 = vpack.c.b16 %v185, %v184
  %v216 = vpack.c.b16 %v187, %v186
  %v217 = vpack.c.b16 %v189, %v188
  %v218 = vpack.c.b16 %v191, %v190
  %v219 = vpack.c.b16 %v193, %v192
  %v220 = vpack.c.b16 %v195, %v194
  %v221 = vpack.c.b16 %v197, %v196
  %v222 = vpack.c.b16 %v199, %v198
  %v223 = vpack.c.b16 %v201, %v200
  %v224 = vpack.c.b16 %v203, %v202
  %v225 = vpack.c.b16 %v205, %v204
  %v226 = vpack.c.b16 %v207, %v206
  %v227 = vpack.c.b16 %v209, %v208
  %v228 = vpack.c.b16 %v211, %v210
  %v229 = vpack.c.b16 %v213, %v212
  %246 = vmatprep.subr.bf16.mxu0 0
  %247 = vmatpush1.bf16.msra.mxu0 %v214
  %248 = vmatprep.subr.bf16.mxu0 0
  %249 = vmatpush1.bf16.msra.mxu0 %v215
  %250 = vmatprep.subr.bf16.mxu0 0
  %251 = vmatpush1.bf16.msra.mxu0 %v216
  %252 = vmatprep.subr.bf16.mxu0 0
  %253 = vmatpush1.bf16.msra.mxu0 %v217
  %254 = vmatprep.subr.bf16.mxu0 0
  %255 = vmatpush1.bf16.msra.mxu0 %v218
  %256 = vmatprep.subr.bf16.mxu0 0
  %257 = vmatpush1.bf16.msra.mxu0 %v219
  %258 = vmatprep.subr.bf16.mxu0 0
  %259 = vmatpush1.bf16.msra.mxu0 %v220
  %260 = vmatprep.subr.bf16.mxu0 0
  %261 = vmatpush1.bf16.msra.mxu0 %v221
  %262 = vmatprep.subr.bf16.mxu0 0
  %263 = vmatpush1.bf16.msra.mxu0 %v222
  %264 = vmatprep.subr.bf16.mxu0 0
  %265 = vmatpush1.bf16.msra.mxu0 %v223
  %266 = vmatprep.subr.bf16.mxu0 0
  %267 = vmatpush1.bf16.msra.mxu0 %v224
  %268 = vmatprep.subr.bf16.mxu0 0
  %269 = vmatpush1.bf16.msra.mxu0 %v225
  %270 = vmatprep.subr.bf16.mxu0 0
  %271 = vmatpush1.bf16.msra.mxu0 %v226
  %272 = vmatprep.subr.bf16.mxu0 0
  %273 = vmatpush1.bf16.msra.mxu0 %v227
  %274 = vmatprep.subr.bf16.mxu0 0
  %275 = vmatpush1.bf16.msra.mxu0 %v228
  %276 = vmatprep.subr.bf16.mxu0 0
  %277 = vmatpush1.bf16.msra.mxu0 %v229
  %278 = vmatprep.mubr.bf16.mxu0 %v119
  %279 = vmatmul.mubr.bf16.gmra.mrb[0].mxu0 %v118
  %v280 = vpop.f32.mrb[0].mxu0
  %v281 = vadd.f32 %v68, %v280
  %v282 = vpop.f32.mrb[0].mxu0
  %v283 = vpop.f32.mrb[0].mxu0
  %v284 = vadd.f32 %v68, %v283
  %v285 = vpop.f32.mrb[0].mxu0
  %286 = vmatprep.mubr.bf16.mxu0 %v121
  %287 = vmatmul.mubr.bf16.gmra.mrb[0].mxu0 %v120
  %v288 = vpop.f32.mrb[0].mxu0
  %v289 = vadd.f32 %v68, %v288
  %v290 = vpop.f32.mrb[0].mxu0
  %v291 = vpop.f32.mrb[0].mxu0
  %v292 = vadd.f32 %v68, %v291
  %v293 = vpop.f32.mrb[0].mxu0
  %294 = vmatprep.mubr.bf16.mxu0 %v123
  %295 = vmatmul.mubr.bf16.gmra.mrb[0].mxu0 %v122
  %v296 = vpop.f32.mrb[0].mxu0
  %v297 = vadd.f32 %v68, %v296
  %v298 = vpop.f32.mrb[0].mxu0
  %v299 = vpop.f32.mrb[0].mxu0
  %v300 = vadd.f32 %v68, %v299
  %v301 = vpop.f32.mrb[0].mxu0
  %302 = vmatprep.mubr.bf16.mxu0 %v125
  %303 = vmatmul.mubr.bf16.gmra.mrb[0].mxu0 %v124
  %v304 = vpop.f32.mrb[0].mxu0
  %v305 = vadd.f32 %v68, %v304
  %v306 = vpop.f32.mrb[0].mxu0
  %v307 = vpop.f32.mrb[0].mxu0
  %v308 = vadd.f32 %v68, %v307
  %v309 = vpop.f32.mrb[0].mxu0
  %310 = vmatprep.mubr.bf16.mxu0 %v127
  %311 = vmatmul.mubr.bf16.gmra.mrb[0].mxu0 %v126
  %v312 = vpop.f32.mrb[0].mxu0
  %v313 = vadd.f32 %v68, %v312
  %v314 = vpop.f32.mrb[0].mxu0
  %v315 = vpop.f32.mrb[0].mxu0
  %v316 = vadd.f32 %v68, %v315
  %v317 = vpop.f32.mrb[0].mxu0
  %318 = vmatprep.mubr.bf16.mxu0 %v129
  %319 = vmatmul.mubr.bf16.gmra.mrb[0].mxu0 %v128
  %v320 = vpop.f32.mrb[0].mxu0
  %v321 = vadd.f32 %v68, %v320
  %v322 = vpop.f32.mrb[0].mxu0
  %v323 = vpop.f32.mrb[0].mxu0
  %v324 = vadd.f32 %v68, %v323
  %v325 = vpop.f32.mrb[0].mxu0
  %326 = vmatprep.mubr.bf16.mxu0 %v131
  %327 = vmatmul.mubr.bf16.gmra.mrb[0].mxu0 %v130
  %v328 = vpop.f32.mrb[0].mxu0
  %v329 = vadd.f32 %v68, %v328
  %v330 = vpop.f32.mrb[0].mxu0
  %v331 = vpop.f32.mrb[0].mxu0
  %v332 = vadd.f32 %v68, %v331
  %v333 = vpop.f32.mrb[0].mxu0
  %334 = vmatprep.mubr.bf16.mxu0 %v133
  %335 = vmatmul.mubr.bf16.gmra.mrb[0].mxu0 %v132
  %v336 = vpop.f32.mrb[0].mxu0
  %v337 = vadd.f32 %v68, %v336
  %v338 = vpop.f32.mrb[0].mxu0
  %v339 = vpop.f32.mrb[0].mxu0
  %v340 = vadd.f32 %v68, %v339
  %v341 = vpop.f32.mrb[0].mxu0
  %342 = vdwg.mxu0
  %v343 = vmax.f32 %v281, 0.0
  %v344 = vmax.f32 %v284, 0.0
  %v345 = vmax.f32 %v289, 0.0
  %v346 = vmax.f32 %v292, 0.0
  %v347 = vmax.f32 %v297, 0.0
  %v348 = vmax.f32 %v300, 0.0
  %v349 = vmax.f32 %v305, 0.0
  %v350 = vmax.f32 %v308, 0.0
  %v351 = vmax.f32 %v313, 0.0
  %v352 = vmax.f32 %v316, 0.0
  %v353 = vmax.f32 %v321, 0.0
  %v354 = vmax.f32 %v324, 0.0
  %v355 = vmax.f32 %v329, 0.0
  %v356 = vmax.f32 %v332, 0.0
  %v357 = vmax.f32 %v337, 0.0
  %v358 = vmax.f32 %v340, 0.0
  %359 = vst [vmem:[%s3] sm:$0xff] %v343
  %360 = vst [vmem:[%s3 + $0x8] sm:$0xff] %v344
  %361 = vst [vmem:[%s3 + $0x10] sm:$0xff] %v345
  %362 = vst [vmem:[%s3 + $0x18] sm:$0xff] %v346
  %363 = vst [vmem:[%s3 + $0x20] sm:$0xff] %v347
  %364 = vst [vmem:[%s3 + $0x28] sm:$0xff] %v348
  %365 = vst [vmem:[%s3 + $0x30] sm:$0xff] %v349
  %366 = vst [vmem:[%s3 + $0x38] sm:$0xff] %v350
  %367 = vst [vmem:[%s3 + $0x40] sm:$0xff] %v351
  %368 = vst [vmem:[%s3 + $0x48] sm:$0xff] %v352
  %369 = vst [vmem:[%s3 + $0x50] sm:$0xff] %v353
  %370 = vst [vmem:[%s3 + $0x58] sm:$0xff] %v354
  %371 = vst [vmem:[%s3 + $0x60] sm:$0xff] %v355
  %372 = vst [vmem:[%s3 + $0x68] sm:$0xff] %v356
  %373 = vst [vmem:[%s3 + $0x70] sm:$0xff] %v357
  %374 = vst [vmem:[%s3 + $0x78] sm:$0xff] %v358
  // Predicated region
  $region14: #{thermal_net_resnet_forward.2} parent=0 // pred_check
    _
  $region15: #{thermal_net_resnet_forward.2} parent=0 // pred_check_branch
    %376 = sbr.rel (0) target = $region17
  $region16: #{thermal_net_resnet_forward.2} parent=0 // pred_region
    _
  $region17: #{thermal_net_resnet_forward.2} parent=0 // pred_fallthru
    _
  // Predicated region
  $region18: #{thermal_net_resnet_forward.2} parent=0 // pred_check
    _
  $region19: #{thermal_net_resnet_forward.2} parent=0 // pred_check_branch
    %378 = sbr.rel (0) target = $region21
  $region20: #{thermal_net_resnet_forward.2} parent=0 // pred_region
    _
  $region21: #{thermal_net_resnet_forward.2} parent=0 // pred_fallthru
    _

</llo_original>
